<compile_context>
chip_gen: v6e
topology: v6e:2x2x1
jax: 0.10.0
libtpu: 0.0.40
codegen_flags: <defaults>
</compile_context>

<pallas_src>
import jax
import jax.numpy as jnp
from jax.experimental import pallas as pl
from jax.experimental.pallas import tpu as pltpu


def _round_up(v, m):
    return ((v + m - 1) // m) * m


def _pick_tk(K):
    """Reduction tile along K: full K when small, else a 128-aligned divisor."""
    if K <= 2048:
        return K
    for cand in range(2048, 127, -128):
        if K % cand == 0:
            return cand
    return K  # fall back: full-K block (always legal)


def _pick_tm(M, tk, E_pad, vmem_budget_bytes):
    """Largest multiple-of-8 divisor of M whose per-step VMEM footprint fits.

    Footprint: double-buffered bf16 A tile + double-buffered bf16 W tile +
    resident f32 bias + double-buffered f32 output tile + f32 accumulator.
    Keeps >= 2 grid steps along M (pipelining + v7x dual-TC sharding).
    """
    fixed = 2 * tk * E_pad * 2 + 2 * E_pad * 4

    def fits(tm):
        a_bytes = 2 * tm * tk * 2        # bf16 A, double-buffered
        o_bytes = 2 * tm * E_pad * 4     # f32 out, double-buffered
        acc_bytes = tm * E_pad * 4       # f32 accumulator scratch
        return fixed + a_bytes + o_bytes + acc_bytes <= vmem_budget_bytes

    if M < 16:
        return M
    hi = min(2048, M // 2)               # >= 2 M-steps
    hi -= hi % 8
    for tm in range(hi, 7, -8):
        if M % tm == 0 and fits(tm):
            return tm
    return M  # full-dim block bypasses the (8,128) rule; grid may collapse to 1


def _patch_embed_kernel(a_ref, w_ref, b_ref, o_ref, acc_ref):
    # a_ref: (tm, tk) bf16 patch rows, w_ref: (tk, E_pad) bf16,
    # b_ref: (1, E_pad) f32, o_ref: (tm, E_pad) f32, acc_ref: (tm, E_pad) f32.
    k = pl.program_id(1)

    @pl.when(k == 0)
    def _():
        acc_ref[...] = jnp.zeros_like(acc_ref)

    acc_ref[...] += jnp.dot(a_ref[...], w_ref[...],
                            preferred_element_type=jnp.float32)

    @pl.when(k == pl.num_programs(1) - 1)
    def _():
        o_ref[...] = (acc_ref[...] + b_ref[...]).astype(o_ref.dtype)


def patch_embed_voxel(x, weight, bias, patch_size):
    """x: (B, C, X, Y, Z); weight: (E, C, p, p, p); bias: (E,).

    Returns (B, num_patches, E) float32, identical semantics to
    PatchEmbed_Voxel.forward (matmul runs on the bf16 MXU path, f32 accumulate).
    """
    B, C, X, Y, Z = x.shape
    p = int(patch_size)
    E = weight.shape[0]
    Px, Py, Pz = X // p, Y // p, Z // p
    N = Px * Py * Pz
    K = C * p * p * p
    M = B * N

    # --- glue (bf16): extract non-overlapping patches, flatten in
    # (c, kx, ky, kz) order.  bf16 halves this pass's extra HBM traffic.
    xb = x.astype(jnp.bfloat16)
    xp = xb.reshape(B, C, Px, p, Py, p, Pz, p)
    xp = xp.transpose(0, 2, 4, 6, 1, 3, 5, 7)           # (B,Px,Py,Pz,C,p,p,p)
    patches = xp.reshape(M, K)                          # (M, K) bf16

    # conv weight (E,C,p,p,p) -> matmul weight (K, E_pad), same K ordering;
    # pad E up to a full lane width (128) with zero columns for dense stores.
    E_pad = _round_up(max(E, 128), 128)
    w_mat = weight.astype(jnp.bfloat16).reshape(E, K).T  # (K, E) bf16
    b_vec = bias.astype(jnp.float32)
    if E_pad != E:
        w_mat = jnp.pad(w_mat, ((0, 0), (0, E_pad - E)))
        b_vec = jnp.pad(b_vec, (0, E_pad - E))
    b_mat = b_vec.reshape(1, E_pad)                      # (1, E_pad) f32

    tk = _pick_tk(K)
    vmem_budget = 40 * 1024 * 1024          # leave headroom even on v7x (64 MiB)
    tm = _pick_tm(M, tk, E_pad, vmem_budget)

    out = pl.pallas_call(
        _patch_embed_kernel,
        out_shape=jax.ShapeDtypeStruct((M, E_pad), jnp.float32),
        grid_spec=pltpu.PrefetchScalarGridSpec(
            num_scalar_prefetch=0,
            grid=(M // tm, K // tk),
            in_specs=[
                pl.BlockSpec((tm, tk), lambda i, k: (i, k)),     # patches
                pl.BlockSpec((tk, E_pad), lambda i, k: (k, 0)),  # weight
                pl.BlockSpec((1, E_pad), lambda i, k: (0, 0)),   # bias
            ],
            out_specs=pl.BlockSpec((tm, E_pad), lambda i, k: (i, 0)),
            scratch_shapes=[pltpu.VMEM((tm, E_pad), jnp.float32)],
        ),
        compiler_params=pltpu.CompilerParams(
            dimension_semantics=("parallel", "arbitrary"),
            vmem_limit_bytes=48 * 1024 * 1024,
        ),
    )(patches, w_mat, b_mat)

    return out[:, :E].reshape(B, N, E)


if __name__ == "__main__":
    # Small config consistent with the module: voxel_size=16, patch_size=4,
    # in_chans=4, embed_dim=32, batch=2  ->  num_patches = 4*4*4 = 64.
    B, C, V, p, E = 2, 4, 16, 4, 32

    key = jax.random.PRNGKey(0)
    kx, kw, kb = jax.random.split(key, 3)
    x = jax.random.normal(kx, (B, C, V, V, V), dtype=jnp.float32)
    fan_in = C * p * p * p
    weight = jax.random.normal(kw, (E, C, p, p, p), dtype=jnp.float32) / jnp.sqrt(fan_in)
    bias = jax.random.normal(kb, (E,), dtype=jnp.float32) * 0.01

    out = jax.block_until_ready(patch_embed_voxel(x, weight, bias, p))

    # Reference: strided Conv3d via lax on bf16-rounded inputs (the kernel's
    # MXU path multiplies bf16 exactly and accumulates in f32), then
    # flatten(2).transpose(1,2).
    x_bf = x.astype(jnp.bfloat16).astype(jnp.float32)
    w_bf = weight.astype(jnp.bfloat16).astype(jnp.float32)
    ref = jax.lax.conv_general_dilated(
        x_bf, w_bf, window_strides=(p, p, p), padding="VALID",
        dimension_numbers=("NCDHW", "OIDHW", "NCDHW"))
    ref = ref + bias.reshape(1, E, 1, 1, 1)
    ref = ref.reshape(B, E, -1).transpose(0, 2, 1)

    assert out.shape == (B, (V // p) ** 3, E), out.shape
    max_err = float(jnp.max(jnp.abs(out - ref)))
    assert jnp.allclose(out, ref, atol=1e-2, rtol=1e-2), max_err
    print("KERNEL_OK")
</pallas_src>

<mosaic_0001>
module attributes {stable_mosaic.version = 11 : i64} {
  func.func @_patch_embed_kernel(%arg0: i32, %arg1: i32, %arg2: memref<64x256xbf16, #tpu.memory_space<vmem>>, %arg3: memref<256x128xbf16, #tpu.memory_space<vmem>>, %arg4: memref<1x128xf32, #tpu.memory_space<vmem>>, %arg5: memref<64x128xf32, #tpu.memory_space<vmem>>, %arg6: memref<64x128xf32, #tpu.memory_space<vmem>>) attributes {dimension_semantics = [#tpu.dimension_semantics<parallel>, #tpu.dimension_semantics<arbitrary>], iteration_bounds = array<i64: 2, 1>, scalar_prefetch = 0 : i64, scratch_operands = 1 : i64, tpu.core_type = #tpu.core_type<tc>, window_params = [{transform_indices = @transform_0, window_bounds = array<i64: 64, 256>}, {transform_indices = @transform_1, window_bounds = array<i64: 256, 128>}, {pipeline_mode = #tpu.pipeline_mode<synchronous>, transform_indices = @transform_2, window_bounds = array<i64: 1, 128>}, {transform_indices = @transform_3, window_bounds = array<i64: 64, 128>}]} {
    %c0_i32 = arith.constant 0 : i32
    %0 = arith.cmpi eq, %arg1, %c0_i32 : i32
    %1 = arith.extui %0 : i1 to i32
    %c0_i32_0 = arith.constant 0 : i32
    %2 = arith.cmpi ne, %1, %c0_i32_0 : i32
    scf.if %2 {
      %cst_10 = arith.constant 0.000000e+00 : f32
      %12 = vector.broadcast %cst_10 : f32 to vector<64x128xf32>
      %c0_11 = arith.constant 0 : index
      %c0_12 = arith.constant 0 : index
      %13 = vector.load %arg6[%c0_11, %c0_12] : memref<64x128xf32, #tpu.memory_space<vmem>>, vector<64x128xf32>
      tpu.vector_store %arg6[%c0_11, %c0_12], %12 {strides = array<i32>} : memref<64x128xf32, #tpu.memory_space<vmem>>, vector<64x128xf32>,
    } else {
    }
    %c0 = arith.constant 0 : index
    %c0_1 = arith.constant 0 : index
    %3 = vector.load %arg6[%c0, %c0_1] : memref<64x128xf32, #tpu.memory_space<vmem>>, vector<64x128xf32>
    %c0_2 = arith.constant 0 : index
    %c0_3 = arith.constant 0 : index
    %4 = vector.load %arg2[%c0_2, %c0_3] : memref<64x256xbf16, #tpu.memory_space<vmem>>, vector<64x256xbf16>
    %c0_4 = arith.constant 0 : index
    %c0_5 = arith.constant 0 : index
    %5 = vector.load %arg3[%c0_4, %c0_5] : memref<256x128xbf16, #tpu.memory_space<vmem>>, vector<256x128xbf16>
    %cst = arith.constant dense<0.000000e+00> : vector<64x128xf32>
    %6 = tpu.matmul %4, %5, %cst {dimension_numbers = #tpu.dot_dimension_numbers<[1], [0], [0], [1], [0, 0, 1, 1], [], []>} : vector<64x256xbf16>, vector<256x128xbf16>, vector<64x128xf32> -> vector<64x128xf32>
    %7 = arith.addf %3, %6 : vector<64x128xf32>
    %c0_6 = arith.constant 0 : index
    %c0_7 = arith.constant 0 : index
    %8 = vector.load %arg6[%c0_6, %c0_7] : memref<64x128xf32, #tpu.memory_space<vmem>>, vector<64x128xf32>
    tpu.vector_store %arg6[%c0_6, %c0_7], %7 {strides = array<i32>} : memref<64x128xf32, #tpu.memory_space<vmem>>, vector<64x128xf32>,
    %c0_i32_8 = arith.constant 0 : i32
    %9 = arith.cmpi eq, %arg1, %c0_i32_8 : i32
    %10 = arith.extui %9 : i1 to i32
    %c0_i32_9 = arith.constant 0 : i32
    %11 = arith.cmpi ne, %10, %c0_i32_9 : i32
    scf.if %11 {
      %c0_10 = arith.constant 0 : index
      %c0_11 = arith.constant 0 : index
      %12 = vector.load %arg6[%c0_10, %c0_11] : memref<64x128xf32, #tpu.memory_space<vmem>>, vector<64x128xf32>
      %c0_12 = arith.constant 0 : index
      %c0_13 = arith.constant 0 : index
      %13 = vector.load %arg4[%c0_12, %c0_13] : memref<1x128xf32, #tpu.memory_space<vmem>>, vector<1x128xf32>
      %14 = vector.broadcast %13 : vector<1x128xf32> to vector<64x128xf32>
      %15 = arith.addf %12, %14 : vector<64x128xf32>
      %c0_14 = arith.constant 0 : index
      %c0_15 = arith.constant 0 : index
      %16 = vector.load %arg5[%c0_14, %c0_15] : memref<64x128xf32, #tpu.memory_space<vmem>>, vector<64x128xf32>
      tpu.vector_store %arg5[%c0_14, %c0_15], %15 {strides = array<i32>} : memref<64x128xf32, #tpu.memory_space<vmem>>, vector<64x128xf32>,
    } else {
    }
    return
  }
  func.func @transform_0(%arg0: i32, %arg1: i32) -> (i32, i32) {
    %c0_i32 = arith.constant 0 : i32
    return %arg0, %arg1 : i32, i32
  }
  func.func @transform_1(%arg0: i32, %arg1: i32) -> (i32, i32) {
    %c0_i32 = arith.constant 0 : i32
    %c0_i32_0 = arith.constant 0 : i32
    return %arg1, %c0_i32 : i32, i32
  }
  func.func @transform_2(%arg0: i32, %arg1: i32) -> (i32, i32) {
    %c0_i32 = arith.constant 0 : i32
    %c0_i32_0 = arith.constant 0 : i32
    %c0_i32_1 = arith.constant 0 : i32
    return %c0_i32, %c0_i32_0 : i32, i32
  }
  func.func @transform_3(%arg0: i32, %arg1: i32) -> (i32, i32) {
    %c0_i32 = arith.constant 0 : i32
    %c0_i32_0 = arith.constant 0 : i32
    return %arg0, %c0_i32 : i32, i32
  }
}

</mosaic_0001>

<llo_original>
// kernel: tpu_custom_call.1
$region0: #{tpu_custom_call.1}
  #allocation0 [shape = 'u32[]', space=smem, size = 0x4, offset = 0x4, fixed_abs, tag = 'smem constant byte address 0x4 - core index']
  #allocation1 [shape = 'u32[144,128]{1,0:T(1,128)}', space=vmem, size = 0x12000, scoped, tag = 'internal scratch']
  #allocation2 [shape = 'f32[64,128]{1,0:T(8,128)}', space=vmem, size = 0x8000, scoped, tag = 'scratch operand']
  %s0 = inlined_call_operand.hbm [shape: bf16[128,256], index: 0, kind: input, shape index: {}]
  %s1 = inlined_call_operand.hbm [shape: bf16[256,128], index: 1, kind: input, shape index: {}]
  %s2 = inlined_call_operand.vmem [shape: f32[1,128], index: 2, kind: input, shape index: {}]
  %s3 = inlined_call_operand.hbm [shape: f32[128,128], index: 3, kind: output, shape index: {}]
  %s4 = sld [smem:[#allocation0]]
  $region61: #{tpu_custom_call.1} parent=0
    _
  %s6 = ssub.s32 1, %s4
  %s7 = scalar_select 0, %s6, %s4
  $region1: #{tpu_custom_call.1} parent=0
    #allocation3 [shape = 'u8[65536]{0}', space=vmem, size = 0x10000, scoped, tag = 'input window, operand 0']
    #allocation4 [shape = 's32[2]{0}', space=sflag, size = 0x8, scoped, tag = 'scoped memory for tpu_custom_call.1']
    #allocation5 [shape = 's32[2]{0}', space=sflag, size = 0x8, scoped, tag = 'scoped memory for tpu_custom_call.1']
    #allocation6 [shape = 'u8[65536]{0}', space=vmem, size = 0x10000, scoped, tag = 'input window, operand 1, single buffered']
    #allocation7 [shape = 's32[1]{0}', space=sflag, size = 0x4, scoped, tag = 'scoped memory for tpu_custom_call.1']
    #allocation8 [shape = 'u8[65536]{0}', space=vmem, size = 0x10000, scoped, tag = 'output window, operand 0']
    %8 = vsyncpa [#allocation4], 0
    %s9 = scalar_lea.sflag [#allocation4], 1
    %10 = vsyncpa %s9, 0
    %11 = vsyncpa [#allocation7], 0
    %12 = vsyncpa [#allocation5], 0
    %s13 = scalar_lea.sflag [#allocation5], 1
    %14 = vsyncpa %s13, 0
    loop: start=0, step=1, limit=4
    $region2: #{tpu_custom_call.1} parent=1 // loop_pre_header
      _
    $region3: #{tpu_custom_call.1} parent=1 // loop_header
      %s16 = sphi 0, %s20
      %p17 = scmp.ge.s32.totalorder %s16, 4
      %s23 = sphi 0, %s35
      %s24 = sphi 0, %s31
      %s25 = sphi 0, %s23
      %s26 = sphi 0, %s24
      %s27 = sphi 0, %s25
      %s28 = sphi 0, %s26
      %s40 = sphi 0, %s42
      %s43 = sphi 0, %s40
      %s44 = sphi 0, %s43
      %s60 = sphi 0, %s44
      %s66 = sphi 0, %s68
      %s69 = sphi 0, %s66
      %s70 = sphi 0, %s69
      %s86 = sphi 0, %s70
      %s90 = sphi 0, %s90
      %s92 = sphi 0, %s90
      %s93 = sphi 0, %s92
      %s107 = sphi 0, %s93
      %s113 = sphi 0, %s115
      %s116 = sphi 0, %s113
      %s117 = sphi 0, %s116
      %s133 = sphi 0, %s117
    $region4: #{tpu_custom_call.1} parent=1 // loop_header_branch
      %19 = sbr.rel (%p17) target = $region8
    $region5: #{tpu_custom_call.1} parent=1 // loop_body
      %s21 = ssub.s32 %s16, 1
      %s22 = ssub.s32 %s16, 2
      %s29 = sadd.s32 1, %s24
      %p30 = scmp.ge.s32.totalorder %s29, 1
      %s31 = scalar_select %p30, 0, %s29
      %s32 = sadd.s32 1, %s23
      %s33 = scalar_select %p30, %s32, %s23
      %p34 = scmp.ge.s32.totalorder %s33, 2
      %s35 = scalar_select %p34, 0, %s33
      %s36 = ssub.s32 %s23, %s35
      %s37 = ssub.s32 %s24, %s31
      %s38 = sor.u32 %s36, %s37
      %p39 = scmp.eq.s32.totalorder %s38, 0
      %s41 = sadd.s32 %s40, 1
      %s42 = scalar_select %p39, %s40, %s41
      %p45 = pneg %p39
      %p46 = scmp.eq.s32.totalorder %s16, 1
      %p47 = por %p45, %p46
      %p48 = scmp.ne.s32.totalorder %s40, %s43
      %p49 = scmp.eq.s32.totalorder %s16, 0
      %p50 = por %p48, %p49
      %p51 = scmp.ne.s32.totalorder %s40, %s43
      %p52 = scmp.eq.s32.totalorder %s21, 1
      %p53 = por %p51, %p52
      %p54 = scmp.ne.s32.totalorder %s43, %s44
      %p55 = scmp.eq.s32.totalorder %s21, 0
      %p56 = por %p54, %p55
      %p57 = scmp.ne.s32.totalorder %s43, %s44
      %p58 = scmp.eq.s32.totalorder %s22, 1
      %p59 = por %p57, %p58
      %p61 = scmp.ne.s32.totalorder %s44, %s60
      %p62 = scmp.eq.s32.totalorder %s22, 0
      %p63 = por %p61, %p62
      %s64 = ssub.s32 %s24, %s31
      %p65 = scmp.eq.s32.totalorder %s64, 0
      %s67 = sadd.s32 %s66, 1
      %s68 = scalar_select %p65, %s66, %s67
      %p71 = pneg %p65
      %p72 = scmp.eq.s32.totalorder %s16, 1
      %p73 = por %p71, %p72
      %p74 = scmp.ne.s32.totalorder %s66, %s69
      %p75 = scmp.eq.s32.totalorder %s16, 0
      %p76 = por %p74, %p75
      %p77 = scmp.ne.s32.totalorder %s66, %s69
      %p78 = scmp.eq.s32.totalorder %s21, 1
      %p79 = por %p77, %p78
      %p80 = scmp.ne.s32.totalorder %s69, %s70
      %p81 = scmp.eq.s32.totalorder %s21, 0
      %p82 = por %p80, %p81
      %p83 = scmp.ne.s32.totalorder %s69, %s70
      %p84 = scmp.eq.s32.totalorder %s22, 1
      %p85 = por %p83, %p84
      %p87 = scmp.ne.s32.totalorder %s70, %s86
      %p88 = scmp.eq.s32.totalorder %s22, 0
      %p89 = por %p87, %p88
      %s91 = sadd.s32 %s90, 1
      %p94 = scmp.eq.s32.totalorder %s16, 1
      %p95 = scmp.ne.s32.totalorder %s90, %s92
      %p96 = scmp.eq.s32.totalorder %s16, 0
      %p97 = por %p95, %p96
      %p98 = scmp.ne.s32.totalorder %s90, %s92
      %p99 = scmp.eq.s32.totalorder %s21, 1
      %p100 = por %p98, %p99
      %p101 = scmp.ne.s32.totalorder %s92, %s93
      %p102 = scmp.eq.s32.totalorder %s21, 0
      %p103 = por %p101, %p102
      %p104 = scmp.ne.s32.totalorder %s92, %s93
      %p105 = scmp.eq.s32.totalorder %s22, 1
      %p106 = por %p104, %p105
      %p108 = scmp.ne.s32.totalorder %s93, %s107
      %p109 = scmp.eq.s32.totalorder %s22, 0
      %p110 = por %p108, %p109
      %s111 = ssub.s32 %s23, %s35
      %p112 = scmp.eq.s32.totalorder %s111, 0
      %s114 = sadd.s32 %s113, 1
      %s115 = scalar_select %p112, %s113, %s114
      %p118 = pneg %p112
      %p119 = scmp.eq.s32.totalorder %s16, 1
      %p120 = por %p118, %p119
      %p121 = scmp.ne.s32.totalorder %s113, %s116
      %p122 = scmp.eq.s32.totalorder %s16, 0
      %p123 = por %p121, %p122
      %p124 = scmp.ne.s32.totalorder %s113, %s116
      %p125 = scmp.eq.s32.totalorder %s21, 1
      %p126 = por %p124, %p125
      %p127 = scmp.ne.s32.totalorder %s116, %s117
      %p128 = scmp.eq.s32.totalorder %s21, 0
      %p129 = por %p127, %p128
      %p130 = scmp.ne.s32.totalorder %s116, %s117
      %p131 = scmp.eq.s32.totalorder %s22, 1
      %p132 = por %p130, %p131
      %p134 = scmp.ne.s32.totalorder %s117, %s133
      %p135 = scmp.eq.s32.totalorder %s22, 0
      %p136 = por %p134, %p135
      %p137 = scmp.le.s32.totalorder 1, %s16
      %p138 = scmp.lt.s32.totalorder %s16, 3
      %p139 = pnand %p137, %p138
      %p140 = pneg %p139
      // Predicated region
      $region9: #{tpu_custom_call.1} parent=5 // pred_check
        _
      $region10: #{tpu_custom_call.1} parent=5 // pred_check_branch
        %142 = sbr.rel (%p139) target = $region12
      $region11: #{tpu_custom_call.1} parent=5 // pred_region
        %s143 = ssub.s32 %s16, 1
        // Predicated region
        $region13: #{tpu_custom_call.1} parent=11 // pred_check
          %p144 = pneg %p82
        $region14: #{tpu_custom_call.1} parent=11 // pred_check_branch
          %146 = sbr.rel (%p144) target = $region16
        $region15: #{tpu_custom_call.1} parent=11 // pred_region
          %s147 = smul.u32 32, %s26
          %s149 = ssub.s32 2048, 2048
          %150 = vsyncadd [#allocation7], %s149
          %s151 = smul.addr %s147, 64
          %s152 = scalar_lea.hbm %s1, %s151
          %s153 = sshll.u32 [#allocation6], 4
          %s154 = int_to_ptr.vmem [resolvable:$true] %s153
          %159 = dma.hbm_to_vmem [thread:$0]  %s152, 2048, %s154, [#allocation7], 64, 64, 4
        $region16: #{tpu_custom_call.1} parent=11 // pred_fallthru
          _
        // Predicated region
        $region17: #{tpu_custom_call.1} parent=11 // pred_check
          %p160 = pneg %p103
        $region18: #{tpu_custom_call.1} parent=11 // pred_check_branch
          %162 = sbr.rel (%p160) target = $region20
        $region19: #{tpu_custom_call.1} parent=11 // pred_region
          _
        $region20: #{tpu_custom_call.1} parent=11 // pred_fallthru
          _
      $region12: #{tpu_custom_call.1} parent=5 // pred_fallthru
        _
      %p163 = scmp.lt.s32.totalorder %s16, 2
      // Predicated region
      $region21: #{tpu_custom_call.1} parent=5 // pred_check
        %p164 = pneg %p163
      $region22: #{tpu_custom_call.1} parent=5 // pred_check_branch
        %166 = sbr.rel (%p164) target = $region24
      $region23: #{tpu_custom_call.1} parent=5 // pred_region
        // Predicated region
        $region25: #{tpu_custom_call.1} parent=23 // pred_check
          %p167 = pneg %p50
        $region26: #{tpu_custom_call.1} parent=23 // pred_check_branch
          %169 = sbr.rel (%p167) target = $region28
        $region27: #{tpu_custom_call.1} parent=23 // pred_region
          %s170 = sand.u32 %s40, 1
          %s171 = scalar_lea.sflag [#allocation4], %s170
          %s172 = sand.u32 %s40, 1
          %s173 = smul.addr %s172, 64
          %s174 = scalar_lea.vmem [#allocation3], %s173
          %s175 = smul.u32 8, %s23
          %s176 = smul.u32 2, %s24
          %s178 = ssub.s32 1024, 1024
          %179 = vsyncadd %s171, %s178
          %s180 = smul.addr %s175, 2
          %s181 = sadd.s32 %s176, %s180
          %s182 = smul.addr %s181, 64
          %s183 = scalar_lea.hbm %s0, %s182
          %s184 = sshll.u32 %s174, 4
          %s185 = int_to_ptr.vmem [resolvable:$true] %s184
          %190 = dma.hbm_to_vmem [thread:$0]  %s183, 1024, %s185, %s171, 128, 128, 8
        $region28: #{tpu_custom_call.1} parent=23 // pred_fallthru
          _
      $region24: #{tpu_custom_call.1} parent=5 // pred_fallthru
        _
      %p191 = scmp.le.s32.totalorder 1, %s16
      %p192 = scmp.lt.s32.totalorder %s16, 3
      %p193 = pnand %p191, %p192
      %p194 = pneg %p193
      // Predicated region
      $region29: #{tpu_custom_call.1} parent=5 // pred_check
        _
      $region30: #{tpu_custom_call.1} parent=5 // pred_check_branch
        %196 = sbr.rel (%p193) target = $region32
      $region31: #{tpu_custom_call.1} parent=5 // pred_region
        %s197 = ssub.s32 %s16, 1
        %s198 = sand.u32 %s43, 1
        %s199 = scalar_lea.sflag [#allocation4], %s198
        %s200 = sand.u32 %s43, 1
        %s201 = smul.addr %s200, 64
        %s202 = scalar_lea.vmem [#allocation3], %s201
        // Predicated region
        $region33: #{tpu_custom_call.1} parent=31 // pred_check
          %p203 = pneg %p56
        $region34: #{tpu_custom_call.1} parent=31 // pred_check_branch
          %205 = sbr.rel (%p203) target = $region36
        $region35: #{tpu_custom_call.1} parent=31 // pred_region
          %206 = dma.done %s199, 1024
        $region36: #{tpu_custom_call.1} parent=31 // pred_fallthru
          _
        // Predicated region
        $region37: #{tpu_custom_call.1} parent=31 // pred_check
          %p207 = pneg %p82
        $region38: #{tpu_custom_call.1} parent=31 // pred_check_branch
          %209 = sbr.rel (%p207) target = $region40
        $region39: #{tpu_custom_call.1} parent=31 // pred_region
          %210 = dma.done [#allocation7], 2048
        $region40: #{tpu_custom_call.1} parent=31 // pred_fallthru
          _
        %s211 = sand.u32 %s43, 1
        %s212 = scalar_lea.sflag [#allocation4], %s211
        %s213 = sand.u32 %s43, 1
        %s214 = smul.addr %s213, 64
        %s215 = scalar_lea.vmem [#allocation3], %s214
        %p216 = pneg %p56
        %p217 = pneg %p53
        %p218 = pneg %p82
        %p219 = pneg %p79
        %p220 = pneg %p103
        %p221 = pneg %p100
        %p222 = pneg %p129
        %p223 = pneg %p126
        %s224 = sand.u32 %s116, 1
        %s225 = scalar_lea.sflag [#allocation5], %s224
        %s226 = sand.u32 %s116, 1
        %s227 = smul.addr %s226, 64
        %s228 = scalar_lea.vmem [#allocation8], %s227
        %s229 = smul.u32 8, %s25
        %s230 = smul.u32 2, %s26
        %s231 = smul.u32 32, %s26
        %s232 = smul.u32 8, %s25
        %p234 = scmp.eq.s32.totalorder %s26, 0
        // Predicated region
        $region41: #{tpu_custom_call.1} parent=31 // pred_check
          %p235 = pneg %p234
        $region42: #{tpu_custom_call.1} parent=31 // pred_check_branch
          %237 = sbr.rel (%p235) target = $region44
        $region43: #{tpu_custom_call.1} parent=31 // pred_region
          %238 = vst [vmem:[#allocation2] sm:$0xff] 0.0
          %239 = vst [vmem:[#allocation2 + $0x8] sm:$0xff] 0.0
          %240 = vst [vmem:[#allocation2 + $0x10] sm:$0xff] 0.0
          %241 = vst [vmem:[#allocation2 + $0x18] sm:$0xff] 0.0
          %242 = vst [vmem:[#allocation2 + $0x20] sm:$0xff] 0.0
          %243 = vst [vmem:[#allocation2 + $0x28] sm:$0xff] 0.0
          %244 = vst [vmem:[#allocation2 + $0x30] sm:$0xff] 0.0
          %245 = vst [vmem:[#allocation2 + $0x38] sm:$0xff] 0.0
        $region44: #{tpu_custom_call.1} parent=31 // pred_fallthru
          _
        %v246 = vld [vmem:[#allocation2] sm:$0xff]
        %v247 = vld [vmem:[#allocation2 + $0x8] sm:$0xff]
        %v248 = vld [vmem:[#allocation2 + $0x10] sm:$0xff]
        %v249 = vld [vmem:[#allocation2 + $0x18] sm:$0xff]
        %v250 = vld [vmem:[#allocation2 + $0x20] sm:$0xff]
        %v251 = vld [vmem:[#allocation2 + $0x28] sm:$0xff]
        %v252 = vld [vmem:[#allocation2 + $0x30] sm:$0xff]
        %v253 = vld [vmem:[#allocation2 + $0x38] sm:$0xff]
        %v254 = vld [vmem:[%s202] sm:$0xff]
        %v255 = vld [vmem:[%s202 + $0x8] sm:$0xff]
        %v256 = vld [vmem:[%s202 + $0x10] sm:$0xff]
        %v257 = vld [vmem:[%s202 + $0x18] sm:$0xff]
        %v258 = vld [vmem:[%s202 + $0x20] sm:$0xff]
        %v259 = vld [vmem:[%s202 + $0x28] sm:$0xff]
        %v260 = vld [vmem:[%s202 + $0x30] sm:$0xff]
        %v261 = vld [vmem:[%s202 + $0x38] sm:$0xff]
        %v262 = vld [vmem:[#allocation6] sm:$0xf]
        %v263 = vld [vmem:[#allocation6 + $0x4] sm:$0xf]
        %v264 = vld [vmem:[#allocation6 + $0x8] sm:$0xf]
        %v265 = vld [vmem:[#allocation6 + $0xc] sm:$0xf]
        %v266 = vld [vmem:[#allocation6 + $0x10] sm:$0xf]
        %v267 = vld [vmem:[#allocation6 + $0x14] sm:$0xf]
        %v268 = vld [vmem:[#allocation6 + $0x18] sm:$0xf]
        %v269 = vld [vmem:[#allocation6 + $0x1c] sm:$0xf]
        %v270 = vld [vmem:[#allocation6 + $0x20] sm:$0xf]
        %v271 = vld [vmem:[#allocation6 + $0x24] sm:$0xf]
        %v272 = vld [vmem:[#allocation6 + $0x28] sm:$0xf]
        %v273 = vld [vmem:[#allocation6 + $0x2c] sm:$0xf]
        %v274 = vld [vmem:[#allocation6 + $0x30] sm:$0xf]
        %v275 = vld [vmem:[#allocation6 + $0x34] sm:$0xf]
        %v276 = vld [vmem:[#allocation6 + $0x38] sm:$0xf]
        %v277 = vld [vmem:[#allocation6 + $0x3c] sm:$0xf]
        %v278 = vld [vmem:[#allocation6 + $0x40] sm:$0xf]
        %v279 = vld [vmem:[#allocation6 + $0x44] sm:$0xf]
        %v280 = vld [vmem:[#allocation6 + $0x48] sm:$0xf]
        %v281 = vld [vmem:[#allocation6 + $0x4c] sm:$0xf]
        %v282 = vld [vmem:[#allocation6 + $0x50] sm:$0xf]
        %v283 = vld [vmem:[#allocation6 + $0x54] sm:$0xf]
        %v284 = vld [vmem:[#allocation6 + $0x58] sm:$0xf]
        %v285 = vld [vmem:[#allocation6 + $0x5c] sm:$0xf]
        %v286 = vld [vmem:[#allocation6 + $0x60] sm:$0xf]
        %v287 = vld [vmem:[#allocation6 + $0x64] sm:$0xf]
        %v288 = vld [vmem:[#allocation6 + $0x68] sm:$0xf]
        %v289 = vld [vmem:[#allocation6 + $0x6c] sm:$0xf]
        %v290 = vld [vmem:[#allocation6 + $0x70] sm:$0xf]
        %v291 = vld [vmem:[#allocation6 + $0x74] sm:$0xf]
        %v292 = vld [vmem:[#allocation6 + $0x78] sm:$0xf]
        %v293 = vld [vmem:[#allocation6 + $0x7c] sm:$0xf]
        %v302 = vunpack.c.l.b16 %v254
        %v303 = vunpack.c.h.b16 %v254
        %v304 = vunpack.c.l.b16 %v255
        %v305 = vunpack.c.h.b16 %v255
        %v306 = vunpack.c.l.b16 %v256
        %v307 = vunpack.c.h.b16 %v256
        %v308 = vunpack.c.l.b16 %v257
        %v309 = vunpack.c.h.b16 %v257
        %v310 = vunpack.c.l.b16 %v258
        %v311 = vunpack.c.h.b16 %v258
        %v312 = vunpack.c.l.b16 %v259
        %v313 = vunpack.c.h.b16 %v259
        %v314 = vunpack.c.l.b16 %v260
        %v315 = vunpack.c.h.b16 %v260
        %v316 = vunpack.c.l.b16 %v261
        %v317 = vunpack.c.h.b16 %v261
        %v318 = vpack.c.b16 %v304, %v302
        %v319 = vpack.c.b16 %v305, %v303
        %v320 = vpack.c.b16 %v308, %v306
        %v321 = vpack.c.b16 %v309, %v307
        %v322 = vpack.c.b16 %v312, %v310
        %v323 = vpack.c.b16 %v313, %v311
        %v324 = vpack.c.b16 %v316, %v314
        %v325 = vpack.c.b16 %v317, %v315
        %v366 = vunpack.c.l.b16 %v262
        %v367 = vunpack.c.l.b16 %v263
        %v368 = vunpack.c.l.b16 %v264
        %v369 = vunpack.c.l.b16 %v265
        %v370 = vunpack.c.l.b16 %v266
        %v371 = vunpack.c.l.b16 %v267
        %v372 = vunpack.c.l.b16 %v268
        %v373 = vunpack.c.l.b16 %v269
        %v374 = vunpack.c.l.b16 %v270
        %v375 = vunpack.c.l.b16 %v271
        %v376 = vunpack.c.l.b16 %v272
        %v377 = vunpack.c.l.b16 %v273
        %v378 = vunpack.c.l.b16 %v274
        %v379 = vunpack.c.l.b16 %v275
        %v380 = vunpack.c.l.b16 %v276
        %v381 = vunpack.c.l.b16 %v277
        %v382 = vunpack.c.l.b16 %v278
        %v383 = vunpack.c.l.b16 %v279
        %v384 = vunpack.c.l.b16 %v280
        %v385 = vunpack.c.l.b16 %v281
        %v386 = vunpack.c.l.b16 %v282
        %v387 = vunpack.c.l.b16 %v283
        %v388 = vunpack.c.l.b16 %v284
        %v389 = vunpack.c.l.b16 %v285
        %v390 = vunpack.c.l.b16 %v286
        %v391 = vunpack.c.l.b16 %v287
        %v392 = vunpack.c.l.b16 %v288
        %v393 = vunpack.c.l.b16 %v289
        %v394 = vunpack.c.l.b16 %v290
        %v395 = vunpack.c.l.b16 %v291
        %v396 = vunpack.c.l.b16 %v292
        %v397 = vunpack.c.l.b16 %v293
        %v398 = vpack.c.b16 %v367, %v366
        %v399 = vpack.c.b16 %v369, %v368
        %v400 = vpack.c.b16 %v371, %v370
        %v401 = vpack.c.b16 %v373, %v372
        %v402 = vpack.c.b16 %v375, %v374
        %v403 = vpack.c.b16 %v377, %v376
        %v404 = vpack.c.b16 %v379, %v378
        %v405 = vpack.c.b16 %v381, %v380
        %v406 = vpack.c.b16 %v383, %v382
        %v407 = vpack.c.b16 %v385, %v384
        %v408 = vpack.c.b16 %v387, %v386
        %v409 = vpack.c.b16 %v389, %v388
        %v410 = vpack.c.b16 %v391, %v390
        %v411 = vpack.c.b16 %v393, %v392
        %v412 = vpack.c.b16 %v395, %v394
        %v413 = vpack.c.b16 %v397, %v396
        %430 = vmatprep.subr.bf16.mxu0 0
        %431 = vmatpush1.bf16.msra.mxu0 %v405
        %432 = vmatprep.subr.bf16.mxu0 0
        %433 = vmatpush1.bf16.msra.mxu0 %v404
        %434 = vmatprep.subr.bf16.mxu0 0
        %435 = vmatpush1.bf16.msra.mxu0 %v403
        %436 = vmatprep.subr.bf16.mxu0 0
        %437 = vmatpush1.bf16.msra.mxu0 %v402
        %438 = vmatprep.subr.bf16.mxu0 0
        %439 = vmatpush1.bf16.msra.mxu0 %v401
        %440 = vmatprep.subr.bf16.mxu0 0
        %441 = vmatpush1.bf16.msra.mxu0 %v400
        %442 = vmatprep.subr.bf16.mxu0 0
        %443 = vmatpush1.bf16.msra.mxu0 %v399
        %444 = vmatprep.subr.bf16.mxu0 0
        %445 = vmatpush1.bf16.msra.mxu0 %v398
        %446 = vmatprep.subr.bf16.mxu0 0
        %447 = vmatpush2.bf16.msra.mxu0 %v413
        %448 = vmatprep.subr.bf16.mxu0 0
        %449 = vmatpush2.bf16.msra.mxu0 %v412
        %450 = vmatprep.subr.bf16.mxu0 0
        %451 = vmatpush2.bf16.msra.mxu0 %v411
        %452 = vmatprep.subr.bf16.mxu0 0
        %453 = vmatpush2.bf16.msra.mxu0 %v410
        %454 = vmatprep.subr.bf16.mxu0 0
        %455 = vmatpush2.bf16.msra.mxu0 %v409
        %456 = vmatprep.subr.bf16.mxu0 0
        %457 = vmatpush2.bf16.msra.mxu0 %v408
        %458 = vmatprep.subr.bf16.mxu0 0
        %459 = vmatpush2.bf16.msra.mxu0 %v407
        %460 = vmatprep.subr.bf16.mxu0 0
        %461 = vmatpush2.bf16.msra.mxu0 %v406
        %462 = vmatprep.mubr.bf16.mxu0 %v319
        %463 = vmatmul.mubr.bf16.gmra.mxu0 %v318
        %v464 = vpop.f32.mrf.mxu0
        %v465 = vadd.f32 0.0, %v464
        %v466 = vpop.f32.mrf.mxu0
        %v467 = vpop.f32.mrf.mxu0
        %v468 = vadd.f32 0.0, %v467
        %v469 = vpop.f32.mrf.mxu0
        %470 = vmatprep.mubr.bf16.mxu0 %v321
        %471 = vmatmul.mubr.bf16.gmra.mxu0 %v320
        %v472 = vpop.f32.mrf.mxu0
        %v473 = vadd.f32 0.0, %v472
        %v474 = vpop.f32.mrf.mxu0
        %v475 = vpop.f32.mrf.mxu0
        %v476 = vadd.f32 0.0, %v475
        %v477 = vpop.f32.mrf.mxu0
        %478 = vmatprep.mubr.bf16.mxu0 %v323
        %479 = vmatmul.mubr.bf16.gmra.mxu0 %v322
        %v480 = vpop.f32.mrf.mxu0
        %v481 = vadd.f32 0.0, %v480
        %v482 = vpop.f32.mrf.mxu0
        %v483 = vpop.f32.mrf.mxu0
        %v484 = vadd.f32 0.0, %v483
        %v485 = vpop.f32.mrf.mxu0
        %486 = vmatprep.mubr.bf16.mxu0 %v325
        %487 = vmatmul.mubr.bf16.gmra.mxu0 %v324
        %v488 = vpop.f32.mrf.mxu0
        %v489 = vadd.f32 0.0, %v488
        %v490 = vpop.f32.mrf.mxu0
        %v491 = vpop.f32.mrf.mxu0
        %v492 = vadd.f32 0.0, %v491
        %v493 = vpop.f32.mrf.mxu0
        %494 = vdwg.mxu0
        %v495 = vadd.f32 %v246, %v465
        %v496 = vadd.f32 %v247, %v468
        %v497 = vadd.f32 %v248, %v473
        %v498 = vadd.f32 %v249, %v476
        %v499 = vadd.f32 %v250, %v481
        %v500 = vadd.f32 %v251, %v484
        %v501 = vadd.f32 %v252, %v489
        %v502 = vadd.f32 %v253, %v492
        %503 = vst [vmem:[#allocation2] sm:$0xff] %v495
        %504 = vst [vmem:[#allocation2 + $0x8] sm:$0xff] %v496
        %505 = vst [vmem:[#allocation2 + $0x10] sm:$0xff] %v497
        %506 = vst [vmem:[#allocation2 + $0x18] sm:$0xff] %v498
        %507 = vst [vmem:[#allocation2 + $0x20] sm:$0xff] %v499
        %508 = vst [vmem:[#allocation2 + $0x28] sm:$0xff] %v500
        %509 = vst [vmem:[#allocation2 + $0x30] sm:$0xff] %v501
        %510 = vst [vmem:[#allocation2 + $0x38] sm:$0xff] %v502
        // Predicated region
        $region45: #{tpu_custom_call.1} parent=31 // pred_check
          %p511 = pneg %p234
        $region46: #{tpu_custom_call.1} parent=31 // pred_check_branch
          %513 = sbr.rel (%p511) target = $region48
        $region47: #{tpu_custom_call.1} parent=31 // pred_region
          %v514 = vld [vmem:[#allocation2] sm:$0xff]
          %v515 = vld [vmem:[#allocation2 + $0x8] sm:$0xff]
          %v516 = vld [vmem:[#allocation2 + $0x10] sm:$0xff]
          %v517 = vld [vmem:[#allocation2 + $0x18] sm:$0xff]
          %v518 = vld [vmem:[#allocation2 + $0x20] sm:$0xff]
          %v519 = vld [vmem:[#allocation2 + $0x28] sm:$0xff]
          %v520 = vld [vmem:[#allocation2 + $0x30] sm:$0xff]
          %v521 = vld [vmem:[#allocation2 + $0x38] sm:$0xff]
          %v522 = vld [vmem:[%s2] sm:$0x1]
          %v524 = vlaneseq
          %v525 = vshrl.u32 %v524, 7
          %v526 = vsub.s32 0, %v525
          %v527 = vrot.slane %v522, %v526
          %v529 = vadd.f32 %v514, %v527
          %v530 = vadd.f32 %v515, %v527
          %v531 = vadd.f32 %v516, %v527
          %v532 = vadd.f32 %v517, %v527
          %v533 = vadd.f32 %v518, %v527
          %v534 = vadd.f32 %v519, %v527
          %v535 = vadd.f32 %v520, %v527
          %v536 = vadd.f32 %v521, %v527
          %537 = vst [vmem:[%s228] sm:$0xff] %v529
          %538 = vst [vmem:[%s228 + $0x8] sm:$0xff] %v530
          %539 = vst [vmem:[%s228 + $0x10] sm:$0xff] %v531
          %540 = vst [vmem:[%s228 + $0x18] sm:$0xff] %v532
          %541 = vst [vmem:[%s228 + $0x20] sm:$0xff] %v533
          %542 = vst [vmem:[%s228 + $0x28] sm:$0xff] %v534
          %543 = vst [vmem:[%s228 + $0x30] sm:$0xff] %v535
          %544 = vst [vmem:[%s228 + $0x38] sm:$0xff] %v536
        $region48: #{tpu_custom_call.1} parent=31 // pred_fallthru
          _
        %s545 = sand.u32 %s116, 1
        %s546 = scalar_lea.sflag [#allocation5], %s545
        %s547 = sand.u32 %s116, 1
        %s548 = smul.addr %s547, 64
        %s549 = scalar_lea.vmem [#allocation8], %s548
        // Predicated region
        $region49: #{tpu_custom_call.1} parent=31 // pred_check
          %p550 = pneg %p126
        $region50: #{tpu_custom_call.1} parent=31 // pred_check_branch
          %552 = sbr.rel (%p550) target = $region52
        $region51: #{tpu_custom_call.1} parent=31 // pred_region
          %s553 = smul.u32 8, %s25
          %s555 = ssub.s32 1024, 1024
          %556 = vsyncadd %s546, %s555
          %s557 = smul.addr %s553, 128
          %s558 = scalar_lea.hbm %s3, %s557
          %s559 = sshll.u32 %s549, 4
          %s560 = int_to_ptr.vmem [resolvable:$true] %s559
          %565 = dma.vmem_to_hbm [thread:$0]  %s560, 1024, %s558, %s546, 128, 128, 8
        $region52: #{tpu_custom_call.1} parent=31 // pred_fallthru
          _
      $region32: #{tpu_custom_call.1} parent=5 // pred_fallthru
        _
      %p566 = scmp.le.s32.totalorder 2, %s16
      // Predicated region
      $region53: #{tpu_custom_call.1} parent=5 // pred_check
        %p567 = pneg %p566
      $region54: #{tpu_custom_call.1} parent=5 // pred_check_branch
        %569 = sbr.rel (%p567) target = $region56
      $region55: #{tpu_custom_call.1} parent=5 // pred_region
        %s570 = ssub.s32 %s16, 2
        // Predicated region
        $region57: #{tpu_custom_call.1} parent=55 // pred_check
          %p571 = pneg %p132
        $region58: #{tpu_custom_call.1} parent=55 // pred_check_branch
          %573 = sbr.rel (%p571) target = $region60
        $region59: #{tpu_custom_call.1} parent=55 // pred_region
          %s574 = sand.u32 %s117, 1
          %s575 = scalar_lea.sflag [#allocation5], %s574
          %s576 = sand.u32 %s117, 1
          %s577 = smul.addr %s576, 64
          %s578 = scalar_lea.vmem [#allocation8], %s577
          %579 = dma.done %s575, 1024
        $region60: #{tpu_custom_call.1} parent=55 // pred_fallthru
          _
      $region56: #{tpu_custom_call.1} parent=5 // pred_fallthru
        _
    $region6: #{tpu_custom_call.1} parent=1 // loop_footer
      %s20 = sadd.s32 1, %s16
    $region7: #{tpu_custom_call.1} parent=1 // loop_footer_branch
      %15 = sbr.rel target = $region3
    $region8: #{tpu_custom_call.1} parent=1 // loop_exit
      _
    %580 = vsyncpa [#allocation4], 1
    %s581 = scalar_lea.sflag [#allocation4], 1
    %582 = vsyncpa %s581, 1
    %583 = vsyncpa [#allocation7], 1
    %584 = vsyncpa [#allocation5], 1
    %s585 = scalar_lea.sflag [#allocation5], 1
    %586 = vsyncpa %s585, 1

</llo_original>
